<compile_context>
chip_gen: v5e
topology: v5e:2x2
jax: 0.10.0
libtpu: 0.0.40
codegen_flags: <defaults>
</compile_context>

<pallas_src>
import jax
import jax.numpy as jnp
from jax.experimental import pallas as pl
from jax.experimental.pallas import tpu as pltpu

LEAKY_SLOPE = 0.01  # F.leaky_relu default negative_slope
_LANE = 128


def _round_up(x, m):
    return (x + m - 1) // m * m


def mlp_kernel(x_ref, m_ref, w_ref, b_ref, o_ref):
    # x_ref: (TP*S2, D)   TP polylines' vectors, flattened over the vector axis
    # m_ref: (TP, S2)     mask as float (1.0 / 0.0)
    # w_ref: (D, H)       linear weight, pre-transposed (resident across steps)
    # b_ref: (1, H)       linear bias (f32)
    # o_ref: (TP, S2, 2H) [masked activations | broadcast per-polyline max-pool]
    tp, s2, two_h = o_ref.shape
    h_dim = two_h // 2

    # Linear + leaky_relu over all TP*S2 rows in one MXU call (f32 accumulation).
    h = jnp.dot(x_ref[...], w_ref[...], preferred_element_type=jnp.float32)
    h = h + b_ref[...]
    h = jnp.where(h >= 0.0, h, LEAKY_SLOPE * h)          # (TP*S2, H) f32

    # Per-polyline view; with S2 == 8 this matches the sublane tiling (free).
    h3 = h.reshape(tp, s2, h_dim)                        # (TP, S2, H)

    m = m_ref[...]                                       # (TP, S2) float
    m3 = m[:, :, None]                                   # (TP, S2, 1)

    # out[mask] = h, else 0  -> multiplicative mask (single VPU pass).
    out = h3 * m3

    # Segmented (per-polyline) max over the vector axis on a -inf-masked copy.
    neg = jnp.where(m3 > 0.5, h3, -jnp.inf)              # only remaining full select
    pool = jnp.max(neg, axis=1)                          # (TP, H)
    any_valid = jnp.max(m, axis=1, keepdims=True) > 0.5  # (TP, 1)
    pool = jnp.where(any_valid, pool, 0.0)               # rows w/o valid entry -> 0
    rep = jnp.broadcast_to(pool[:, None, :], (tp, s2, h_dim))

    if two_h % _LANE == 0:
        # Both halves are lane-dense -> two unmasked slice stores.
        o_ref[:, :, :h_dim] = out.astype(o_ref.dtype)
        o_ref[:, :, h_dim:] = rep.astype(o_ref.dtype)
    else:
        # Halves share an (8,128) tile -> assemble once, single unmasked store.
        o_ref[...] = jnp.concatenate([out, rep], axis=-1).astype(o_ref.dtype)


def mlp_forward(input_var, input_mask, W, b, *, out_dtype=None, tp_max=2048):
    """input_var: (B, N1, S2, D), input_mask: (B, N1, S2) bool,
       W: (H, D) (torch nn.Linear layout), b: (H,).
       Pass bf16 input_var / W to halve HBM traffic (f32 accumulation kept)."""
    B, N1, S2, D = input_var.shape
    H = W.shape[0]
    P = B * N1

    in_dtype = input_var.dtype
    if out_dtype is None:
        out_dtype = in_dtype
    isz_in = jnp.dtype(in_dtype).itemsize
    isz_out = jnp.dtype(out_dtype).itemsize

    # ---- VMEM model with lane padding (D, S2, H, 2H all pad to 128 lanes) ----
    d_pad = _round_up(D, _LANE)
    h_pad = _round_up(H, _LANE)
    oh_pad = _round_up(2 * H, _LANE)
    per_poly = (
        2 * S2 * d_pad * isz_in            # x block, double-buffered
        + 2 * _round_up(S2, _LANE) * 4     # mask block (f32), double-buffered
        + 2 * S2 * oh_pad * isz_out        # out block, double-buffered
        + 4 * S2 * h_pad * 4               # f32 temporaries: h, out, neg, rep
        + 1 * S2 * oh_pad * 4              # assembled output tile value
    )

    try:
        vmem_cap = int(pltpu.get_tpu_info().vmem_capacity_bytes)
    except Exception:
        vmem_cap = 64 << 20                # conservative: v7x per-TensorCore VMEM
    budget = max(vmem_cap // 2, 8 << 20)   # leave headroom for compiler scratch

    # ---- choose polylines-per-step (tp) ----
    if P < 8:
        tp = P                             # single full block; no partial handling
    else:
        tp = max(8, min(int(budget // per_poly), int(tp_max)) // 8 * 8)
        if P > 8:
            # keep >= 2 grid steps so the 'parallel' axis can use both TCs on v7x
            tp = min(tp, _round_up(int(pl.cdiv(P, 2)), 8))
        tp = min(tp, _round_up(P, 8))
    n_blk = int(pl.cdiv(P, tp))
    P_pad = n_blk * tp

    # ---- inputs (no padding of x: partial last block; pad only the tiny mask) ----
    xf = input_var.reshape(P * S2, D)                       # free metadata reshape
    m = input_mask.reshape(P, S2).astype(jnp.float32)
    if P_pad != P:
        m = jnp.pad(m, ((0, P_pad - P), (0, 0)))            # padded polylines: mask=0
    wt = W.T.astype(in_dtype)                               # (D, H)
    bb = b.reshape(1, H).astype(jnp.float32)                # (1, H)

    need = tp * per_poly + (1 << 20) + (2 << 20)            # + weights/bias + margin
    vmem_limit = int(min(max(need, 8 << 20), vmem_cap - (2 << 20)))

    cost = pl.CostEstimate(
        flops=2 * P * S2 * D * H,
        transcendentals=0,
        bytes_accessed=(P * S2 * D * isz_in + P * S2 * 4
                        + D * H * isz_in + H * 4
                        + P * S2 * 2 * H * isz_out),
    )

    out = pl.pallas_call(
        mlp_kernel,
        out_shape=jax.ShapeDtypeStruct((P, S2, 2 * H), out_dtype),
        grid_spec=pltpu.PrefetchScalarGridSpec(
            num_scalar_prefetch=0,
            grid=(n_blk,),
            in_specs=[
                pl.BlockSpec((tp * S2, D), lambda p: (p, 0)),
                pl.BlockSpec((tp, S2), lambda p: (p, 0)),
                pl.BlockSpec((D, H), lambda p: (0, 0)),
                pl.BlockSpec((1, H), lambda p: (0, 0)),
            ],
            out_specs=pl.BlockSpec((tp, S2, 2 * H), lambda p: (p, 0, 0)),
        ),
        compiler_params=pltpu.CompilerParams(
            dimension_semantics=("parallel",),
            vmem_limit_bytes=vmem_limit,
        ),
        cost_estimate=cost,
    )(xf, m, wt, bb)

    return out.reshape(B, N1, S2, 2 * H)


def mlp_reference(input_var, input_mask, W, b):
    """Pure-JAX reference mirroring the PyTorch forward exactly (f32)."""
    h = input_var @ W.T + b
    h = jnp.where(h >= 0.0, h, LEAKY_SLOPE * h)
    mask4 = input_mask[..., None]
    out = jnp.where(mask4, h, 0.0)
    out_ = jnp.where(mask4, h, -jnp.inf)
    pool = jnp.max(out_, axis=2, keepdims=True)
    any_m = jnp.any(input_mask, axis=2)
    pool = jnp.where(any_m[..., None, None], pool, 0.0)
    rep = jnp.broadcast_to(pool, out.shape)
    return jnp.concatenate([out, rep], axis=-1)


if __name__ == "__main__":
    # size1=N1, size2=S2, size3=D, hidden=H; N1=5 exercises the partial-block path.
    B, N1, S2, D, H = 2, 5, 8, 16, 32

    key = jax.random.PRNGKey(0)
    k_x, k_m, k_w, k_b = jax.random.split(key, 4)

    input_var = jax.random.normal(k_x, (B, N1, S2, D), dtype=jnp.float32)
    input_mask = jax.random.bernoulli(k_m, 0.7, (B, N1, S2))
    # exercise the "no valid entries" branch for one polyline
    input_mask = input_mask.at[0, 0, :].set(False)
    # guarantee at least one fully valid entry elsewhere
    input_mask = input_mask.at[0, 1, 0].set(True)

    W = 0.1 * jax.random.normal(k_w, (H, D), dtype=jnp.float32)  # nn.Linear weight
    b = 0.1 * jax.random.normal(k_b, (H,), dtype=jnp.float32)    # nn.Linear bias

    ref = mlp_reference(input_var, input_mask, W, b)

    # f32 path: exact parity with the PyTorch module.
    out = mlp_forward(input_var, input_mask, W, b)
    jax.block_until_ready(out)
    assert out.shape == (B, N1, S2, 2 * H)
    assert out.dtype == jnp.float32
    assert jnp.allclose(out, ref, atol=1e-4, rtol=1e-4), "f32 mismatch vs reference"

    # bf16-I/O path: halves HBM read/write traffic; matmul still accumulates in f32.
    out_bf16 = mlp_forward(input_var.astype(jnp.bfloat16), input_mask,
                           W.astype(jnp.bfloat16), b)
    jax.block_until_ready(out_bf16)
    assert out_bf16.dtype == jnp.bfloat16
    assert jnp.allclose(out_bf16.astype(jnp.float32), ref, atol=5e-2, rtol=5e-2), \
        "bf16 mismatch vs reference"

    print("KERNEL_OK")
</pallas_src>

<mosaic_0001>
module attributes {stable_mosaic.version = 11 : i64} {
  func.func @mlp_kernel(%arg0: i32, %arg1: memref<64x16xf32, #tpu.memory_space<vmem>>, %arg2: memref<8x8xf32, #tpu.memory_space<vmem>>, %arg3: memref<16x32xf32, #tpu.memory_space<vmem>>, %arg4: memref<1x32xf32, #tpu.memory_space<vmem>>, %arg5: memref<8x8x64xf32, #tpu.memory_space<vmem>>) attributes {dimension_semantics = [#tpu.dimension_semantics<parallel>], iteration_bounds = array<i64: 2>, scalar_prefetch = 0 : i64, scratch_operands = 0 : i64, tpu.core_type = #tpu.core_type<tc>, window_params = [{transform_indices = @transform_0, window_bounds = array<i64: 64, 16>}, {transform_indices = @transform_1, window_bounds = array<i64: 8, 8>}, {pipeline_mode = #tpu.pipeline_mode<synchronous>, transform_indices = @transform_2, window_bounds = array<i64: 16, 32>}, {pipeline_mode = #tpu.pipeline_mode<synchronous>, transform_indices = @transform_3, window_bounds = array<i64: 1, 32>}, {transform_indices = @transform_4, window_bounds = array<i64: 8, 8, 64>}]} {
    %c0 = arith.constant 0 : index
    %c0_0 = arith.constant 0 : index
    %0 = vector.load %arg1[%c0, %c0_0] : memref<64x16xf32, #tpu.memory_space<vmem>>, vector<64x16xf32>
    %c0_1 = arith.constant 0 : index
    %c0_2 = arith.constant 0 : index
    %1 = vector.load %arg3[%c0_1, %c0_2] : memref<16x32xf32, #tpu.memory_space<vmem>>, vector<16x32xf32>
    %cst = arith.constant dense<0.000000e+00> : vector<64x32xf32>
    %2 = tpu.matmul %0, %1, %cst {dimension_numbers = #tpu.dot_dimension_numbers<[1], [0], [0], [1], [0, 0, 1, 1], [], []>} : vector<64x16xf32>, vector<16x32xf32>, vector<64x32xf32> -> vector<64x32xf32>
    %c0_3 = arith.constant 0 : index
    %c0_4 = arith.constant 0 : index
    %3 = vector.load %arg4[%c0_3, %c0_4] : memref<1x32xf32, #tpu.memory_space<vmem>>, vector<1x32xf32>
    %4 = vector.broadcast %3 : vector<1x32xf32> to vector<64x32xf32>
    %5 = arith.addf %2, %4 : vector<64x32xf32>
    %cst_5 = arith.constant 0.000000e+00 : f32
    %6 = vector.broadcast %cst_5 : f32 to vector<64x32xf32>
    %7 = arith.cmpf oge, %5, %6 : vector<64x32xf32>
    %cst_6 = arith.constant 0.00999999977 : f32
    %8 = vector.broadcast %cst_6 : f32 to vector<64x32xf32>
    %9 = arith.mulf %8, %5 : vector<64x32xf32>
    %10 = arith.select %7, %5, %9 : vector<64x32xi1>, vector<64x32xf32>
    %11 = vector.shape_cast %10 : vector<64x32xf32> to vector<8x8x32xf32>
    %c0_7 = arith.constant 0 : index
    %c0_8 = arith.constant 0 : index
    %12 = vector.load %arg2[%c0_7, %c0_8] : memref<8x8xf32, #tpu.memory_space<vmem>>, vector<8x8xf32>
    %13 = vector.shape_cast %12 : vector<8x8xf32> to vector<8x8x1xf32>
    %14 = vector.broadcast %13 : vector<8x8x1xf32> to vector<8x8x32xf32>
    %15 = arith.mulf %11, %14 : vector<8x8x32xf32>
    %cst_9 = arith.constant 5.000000e-01 : f32
    %16 = vector.broadcast %cst_9 : f32 to vector<8x8x1xf32>
    %17 = arith.cmpf ogt, %13, %16 : vector<8x8x1xf32>
    %cst_10 = arith.constant 0xFF800000 : f32
    %18 = vector.shape_cast %17 : vector<8x8x1xi1> to vector<8x8x1xi1>
    %19 = vector.broadcast %18 : vector<8x8x1xi1> to vector<8x8x32xi1>
    %20 = vector.broadcast %cst_10 : f32 to vector<8x8x32xf32>
    %21 = arith.select %19, %11, %20 : vector<8x8x32xi1>, vector<8x8x32xf32>
    %cst_11 = arith.constant dense<0xFF800000> : vector<8x32xf32>
    %22 = vector.multi_reduction <maximumf>, %21, %cst_11 [1] : vector<8x8x32xf32> to vector<8x32xf32>
    %cst_12 = arith.constant dense<0xFF800000> : vector<8xf32>
    %23 = vector.multi_reduction <maximumf>, %12, %cst_12 [1] : vector<8x8xf32> to vector<8xf32>
    %24 = vector.shape_cast %23 : vector<8xf32> to vector<8x1xf32>
    %cst_13 = arith.constant 5.000000e-01 : f32
    %25 = vector.broadcast %cst_13 : f32 to vector<8x1xf32>
    %26 = arith.cmpf ogt, %24, %25 : vector<8x1xf32>
    %cst_14 = arith.constant 0.000000e+00 : f32
    %27 = vector.shape_cast %26 : vector<8x1xi1> to vector<8x1xi1>
    %28 = vector.broadcast %27 : vector<8x1xi1> to vector<8x32xi1>
    %29 = vector.broadcast %cst_14 : f32 to vector<8x32xf32>
    %30 = arith.select %28, %22, %29 : vector<8x32xi1>, vector<8x32xf32>
    %31 = vector.shape_cast %30 : vector<8x32xf32> to vector<8x1x32xf32>
    %32 = vector.shape_cast %31 : vector<8x1x32xf32> to vector<8x1x32xf32>
    %33 = vector.broadcast %32 : vector<8x1x32xf32> to vector<8x8x32xf32>
    %34 = tpu.concatenate %15, %33 in 2 : vector<8x8x32xf32>, vector<8x8x32xf32> -> vector<8x8x64xf32>
    %c0_15 = arith.constant 0 : index
    %c0_16 = arith.constant 0 : index
    %c0_17 = arith.constant 0 : index
    %35 = vector.load %arg5[%c0_15, %c0_16, %c0_17] : memref<8x8x64xf32, #tpu.memory_space<vmem>>, vector<8x8x64xf32>
    tpu.vector_store %arg5[%c0_15, %c0_16, %c0_17], %34 {strides = array<i32>} : memref<8x8x64xf32, #tpu.memory_space<vmem>>, vector<8x8x64xf32>,
    return
  }
  func.func @transform_0(%arg0: i32) -> (i32, i32) {
    %c0_i32 = arith.constant 0 : i32
    %c0_i32_0 = arith.constant 0 : i32
    return %arg0, %c0_i32 : i32, i32
  }
  func.func @transform_1(%arg0: i32) -> (i32, i32) {
    %c0_i32 = arith.constant 0 : i32
    %c0_i32_0 = arith.constant 0 : i32
    return %arg0, %c0_i32 : i32, i32
  }
  func.func @transform_2(%arg0: i32) -> (i32, i32) {
    %c0_i32 = arith.constant 0 : i32
    %c0_i32_0 = arith.constant 0 : i32
    %c0_i32_1 = arith.constant 0 : i32
    return %c0_i32, %c0_i32_0 : i32, i32
  }
  func.func @transform_3(%arg0: i32) -> (i32, i32) {
    %c0_i32 = arith.constant 0 : i32
    %c0_i32_0 = arith.constant 0 : i32
    %c0_i32_1 = arith.constant 0 : i32
    return %c0_i32, %c0_i32_0 : i32, i32
  }
  func.func @transform_4(%arg0: i32) -> (i32, i32, i32) {
    %c0_i32 = arith.constant 0 : i32
    %c0_i32_0 = arith.constant 0 : i32
    %c0_i32_1 = arith.constant 0 : i32
    return %arg0, %c0_i32, %c0_i32_0 : i32, i32, i32
  }
}

</mosaic_0001>

<llo_original>
// kernel: tpu_custom_call.1
$region0: #{tpu_custom_call.1}
  #allocation0 [shape = 'u32[]', space=smem, size = 0x4, offset = 0x4, fixed_abs, tag = 'smem constant byte address 0x4 - core index']
  #allocation1 [shape = 'u32[72,128]{1,0:T(1,128)}', space=vmem, size = 0x9000, scoped, tag = 'internal scratch']
  %s0 = inlined_call_operand.vmem [shape: f32[80,16], index: 0, kind: input, shape index: {}]
  %s1 = inlined_call_operand.vmem [shape: f32[16,8], index: 1, kind: input, shape index: {}]
  %s2 = inlined_call_operand.vmem [shape: f32[16,32], index: 2, kind: input, shape index: {}]
  %s3 = inlined_call_operand.vmem [shape: f32[1,32], index: 3, kind: input, shape index: {}]
  %s4 = inlined_call_operand.hbm [shape: f32[10,8,64], index: 4, kind: output, shape index: {}]
  %s5 = sld [smem:[#allocation0]]
  $region49: #{tpu_custom_call.1} parent=0
    _
  %s7 = ssub.s32 1, %s5
  %s8 = scalar_select 0, %s7, %s5
  $region1: #{tpu_custom_call.1} parent=0
    #allocation2 [shape = 'u8[65536]{0}', space=vmem, size = 0x10000, scoped, tag = 'output window, operand 0']
    #allocation3 [shape = 's32[2]{0}', space=sflag, size = 0x8, scoped, tag = 'scoped memory for tpu_custom_call.1']
    %9 = vsyncpa [#allocation3], 0
    %s10 = scalar_lea.sflag [#allocation3], 1
    %11 = vsyncpa %s10, 0
    loop: start=0, step=1, limit=4
    $region2: #{tpu_custom_call.1} parent=1 // loop_pre_header
      _
    $region3: #{tpu_custom_call.1} parent=1 // loop_header
      %s13 = sphi 0, %s17
      %p14 = scmp.ge.s32.totalorder %s13, 4
      %s23 = sphi 0, %s25
      %s26 = sphi 0, %s23
      %s27 = sphi 0, %s26
      %s43 = sphi 0, %s27
      %s49 = sphi 0, %s51
      %s52 = sphi 0, %s49
      %s53 = sphi 0, %s52
      %s69 = sphi 0, %s53
      %s73 = sphi 0, %s73
      %s75 = sphi 0, %s73
      %s76 = sphi 0, %s75
      %s90 = sphi 0, %s76
      %s94 = sphi 0, %s94
      %s96 = sphi 0, %s94
      %s97 = sphi 0, %s96
      %s111 = sphi 0, %s97
      %s117 = sphi 0, %s119
      %s120 = sphi 0, %s117
      %s121 = sphi 0, %s120
      %s137 = sphi 0, %s121
    $region4: #{tpu_custom_call.1} parent=1 // loop_header_branch
      %16 = sbr.rel (%p14) target = $region8
    $region5: #{tpu_custom_call.1} parent=1 // loop_body
      %s18 = ssub.s32 %s13, 1
      %s19 = ssub.s32 %s13, 2
      %s20 = sadd.s32 %s13, 1
      %s21 = ssub.s32 %s13, %s20
      %p22 = scmp.eq.s32.totalorder %s21, 0
      %s24 = sadd.s32 %s23, 1
      %s25 = scalar_select %p22, %s23, %s24
      %p28 = pneg %p22
      %p29 = scmp.eq.s32.totalorder %s13, 1
      %p30 = por %p28, %p29
      %p31 = scmp.ne.s32.totalorder %s23, %s26
      %p32 = scmp.eq.s32.totalorder %s13, 0
      %p33 = por %p31, %p32
      %p34 = scmp.ne.s32.totalorder %s23, %s26
      %p35 = scmp.eq.s32.totalorder %s18, 1
      %p36 = por %p34, %p35
      %p37 = scmp.ne.s32.totalorder %s26, %s27
      %p38 = scmp.eq.s32.totalorder %s18, 0
      %p39 = por %p37, %p38
      %p40 = scmp.ne.s32.totalorder %s26, %s27
      %p41 = scmp.eq.s32.totalorder %s19, 1
      %p42 = por %p40, %p41
      %p44 = scmp.ne.s32.totalorder %s27, %s43
      %p45 = scmp.eq.s32.totalorder %s19, 0
      %p46 = por %p44, %p45
      %s47 = ssub.s32 %s13, %s20
      %p48 = scmp.eq.s32.totalorder %s47, 0
      %s50 = sadd.s32 %s49, 1
      %s51 = scalar_select %p48, %s49, %s50
      %p54 = pneg %p48
      %p55 = scmp.eq.s32.totalorder %s13, 1
      %p56 = por %p54, %p55
      %p57 = scmp.ne.s32.totalorder %s49, %s52
      %p58 = scmp.eq.s32.totalorder %s13, 0
      %p59 = por %p57, %p58
      %p60 = scmp.ne.s32.totalorder %s49, %s52
      %p61 = scmp.eq.s32.totalorder %s18, 1
      %p62 = por %p60, %p61
      %p63 = scmp.ne.s32.totalorder %s52, %s53
      %p64 = scmp.eq.s32.totalorder %s18, 0
      %p65 = por %p63, %p64
      %p66 = scmp.ne.s32.totalorder %s52, %s53
      %p67 = scmp.eq.s32.totalorder %s19, 1
      %p68 = por %p66, %p67
      %p70 = scmp.ne.s32.totalorder %s53, %s69
      %p71 = scmp.eq.s32.totalorder %s19, 0
      %p72 = por %p70, %p71
      %s74 = sadd.s32 %s73, 1
      %p77 = scmp.eq.s32.totalorder %s13, 1
      %p78 = scmp.ne.s32.totalorder %s73, %s75
      %p79 = scmp.eq.s32.totalorder %s13, 0
      %p80 = por %p78, %p79
      %p81 = scmp.ne.s32.totalorder %s73, %s75
      %p82 = scmp.eq.s32.totalorder %s18, 1
      %p83 = por %p81, %p82
      %p84 = scmp.ne.s32.totalorder %s75, %s76
      %p85 = scmp.eq.s32.totalorder %s18, 0
      %p86 = por %p84, %p85
      %p87 = scmp.ne.s32.totalorder %s75, %s76
      %p88 = scmp.eq.s32.totalorder %s19, 1
      %p89 = por %p87, %p88
      %p91 = scmp.ne.s32.totalorder %s76, %s90
      %p92 = scmp.eq.s32.totalorder %s19, 0
      %p93 = por %p91, %p92
      %s95 = sadd.s32 %s94, 1
      %p98 = scmp.eq.s32.totalorder %s13, 1
      %p99 = scmp.ne.s32.totalorder %s94, %s96
      %p100 = scmp.eq.s32.totalorder %s13, 0
      %p101 = por %p99, %p100
      %p102 = scmp.ne.s32.totalorder %s94, %s96
      %p103 = scmp.eq.s32.totalorder %s18, 1
      %p104 = por %p102, %p103
      %p105 = scmp.ne.s32.totalorder %s96, %s97
      %p106 = scmp.eq.s32.totalorder %s18, 0
      %p107 = por %p105, %p106
      %p108 = scmp.ne.s32.totalorder %s96, %s97
      %p109 = scmp.eq.s32.totalorder %s19, 1
      %p110 = por %p108, %p109
      %p112 = scmp.ne.s32.totalorder %s97, %s111
      %p113 = scmp.eq.s32.totalorder %s19, 0
      %p114 = por %p112, %p113
      %s115 = ssub.s32 %s13, %s20
      %p116 = scmp.eq.s32.totalorder %s115, 0
      %s118 = sadd.s32 %s117, 1
      %s119 = scalar_select %p116, %s117, %s118
      %p122 = pneg %p116
      %p123 = scmp.eq.s32.totalorder %s13, 1
      %p124 = por %p122, %p123
      %p125 = scmp.ne.s32.totalorder %s117, %s120
      %p126 = scmp.eq.s32.totalorder %s13, 0
      %p127 = por %p125, %p126
      %p128 = scmp.ne.s32.totalorder %s117, %s120
      %p129 = scmp.eq.s32.totalorder %s18, 1
      %p130 = por %p128, %p129
      %p131 = scmp.ne.s32.totalorder %s120, %s121
      %p132 = scmp.eq.s32.totalorder %s18, 0
      %p133 = por %p131, %p132
      %p134 = scmp.ne.s32.totalorder %s120, %s121
      %p135 = scmp.eq.s32.totalorder %s19, 1
      %p136 = por %p134, %p135
      %p138 = scmp.ne.s32.totalorder %s121, %s137
      %p139 = scmp.eq.s32.totalorder %s19, 0
      %p140 = por %p138, %p139
      %p141 = scmp.le.s32.totalorder 1, %s13
      %p142 = scmp.lt.s32.totalorder %s13, 3
      %p143 = pnand %p141, %p142
      %p144 = pneg %p143
      // Predicated region
      $region9: #{tpu_custom_call.1} parent=5 // pred_check
        _
      $region10: #{tpu_custom_call.1} parent=5 // pred_check_branch
        %146 = sbr.rel (%p143) target = $region12
      $region11: #{tpu_custom_call.1} parent=5 // pred_region
        %s147 = ssub.s32 %s13, 1
        // Predicated region
        $region13: #{tpu_custom_call.1} parent=11 // pred_check
          %p148 = pneg %p86
        $region14: #{tpu_custom_call.1} parent=11 // pred_check_branch
          %150 = sbr.rel (%p148) target = $region16
        $region15: #{tpu_custom_call.1} parent=11 // pred_region
          _
        $region16: #{tpu_custom_call.1} parent=11 // pred_fallthru
          _
        // Predicated region
        $region17: #{tpu_custom_call.1} parent=11 // pred_check
          %p151 = pneg %p107
        $region18: #{tpu_custom_call.1} parent=11 // pred_check_branch
          %153 = sbr.rel (%p151) target = $region20
        $region19: #{tpu_custom_call.1} parent=11 // pred_region
          _
        $region20: #{tpu_custom_call.1} parent=11 // pred_fallthru
          _
      $region12: #{tpu_custom_call.1} parent=5 // pred_fallthru
        _
      %p154 = scmp.lt.s32.totalorder %s13, 2
      // Predicated region
      $region21: #{tpu_custom_call.1} parent=5 // pred_check
        %p155 = pneg %p154
      $region22: #{tpu_custom_call.1} parent=5 // pred_check_branch
        %157 = sbr.rel (%p155) target = $region24
      $region23: #{tpu_custom_call.1} parent=5 // pred_region
        // Predicated region
        $region25: #{tpu_custom_call.1} parent=23 // pred_check
          %p158 = pneg %p33
        $region26: #{tpu_custom_call.1} parent=23 // pred_check_branch
          %160 = sbr.rel (%p158) target = $region28
        $region27: #{tpu_custom_call.1} parent=23 // pred_region
          %s161 = smul.u32 8, %s13
          %s162 = ssub.s32 10, %s161
          %p163 = scmp.lt.s32.totalorder %s162, 8
          %s164 = scalar_select %p163, %s162, 8
          %s165 = smul.u32 8, %s164
          %p166 = scmp.lt.s32.totalorder %s161, 9
          %s167 = scalar_select %p166, %s161, 9
          %s168 = smul.addr %s167, 8
          %s169 = scalar_lea.vmem %s0, %s168
          %s170 = smul.u32 8, %s13
          %s171 = ssub.s32 10, %s170
          %p172 = scmp.lt.s32.totalorder %s171, 8
          %s173 = scalar_select %p172, %s171, 8
          %s174 = smul.u32 8, %s173
        $region28: #{tpu_custom_call.1} parent=23 // pred_fallthru
          _
        // Predicated region
        $region29: #{tpu_custom_call.1} parent=23 // pred_check
          %p175 = pneg %p59
        $region30: #{tpu_custom_call.1} parent=23 // pred_check_branch
          %177 = sbr.rel (%p175) target = $region32
        $region31: #{tpu_custom_call.1} parent=23 // pred_region
          %p178 = scmp.lt.s32.totalorder %s13, 1
          %s179 = scalar_select %p178, %s13, 1
          %s180 = smul.addr %s179, 8
          %s181 = scalar_lea.vmem %s1, %s180
        $region32: #{tpu_custom_call.1} parent=23 // pred_fallthru
          _
      $region24: #{tpu_custom_call.1} parent=5 // pred_fallthru
        _
      %p182 = scmp.le.s32.totalorder 1, %s13
      %p183 = scmp.lt.s32.totalorder %s13, 3
      %p184 = pnand %p182, %p183
      %p185 = pneg %p184
      // Predicated region
      $region33: #{tpu_custom_call.1} parent=5 // pred_check
        _
      $region34: #{tpu_custom_call.1} parent=5 // pred_check_branch
        %187 = sbr.rel (%p184) target = $region36
      $region35: #{tpu_custom_call.1} parent=5 // pred_region
        %s188 = ssub.s32 %s13, 1
        %s189 = smul.u32 8, %s18
        %s190 = ssub.s32 10, %s189
        %p191 = scmp.lt.s32.totalorder %s190, 8
        %s192 = scalar_select %p191, %s190, 8
        %s193 = smul.u32 8, %s192
        %p194 = scmp.lt.s32.totalorder %s189, 9
        %s195 = scalar_select %p194, %s189, 9
        %s196 = smul.addr %s195, 8
        %s197 = scalar_lea.vmem %s0, %s196
        %p198 = pneg %p39
        %p199 = pneg %p36
        %p200 = scmp.lt.s32.totalorder %s18, 1
        %s201 = scalar_select %p200, %s18, 1
        %s202 = smul.addr %s201, 8
        %s203 = scalar_lea.vmem %s1, %s202
        %p204 = pneg %p65
        %p205 = pneg %p62
        %p206 = pneg %p86
        %p207 = pneg %p83
        %p208 = pneg %p107
        %p209 = pneg %p104
        %p210 = pneg %p133
        %p211 = pneg %p130
        %s212 = sand.u32 %s120, 1
        %s213 = scalar_lea.sflag [#allocation3], %s212
        %s214 = sand.u32 %s120, 1
        %s215 = smul.addr %s214, 64
        %s216 = scalar_lea.vmem [#allocation2], %s215
        %s217 = smul.u32 8, %s18
        %s218 = ssub.s32 10, %s217
        %p219 = scmp.lt.s32.totalorder %s218, 8
        %s220 = scalar_select %p219, %s218, 8
        %s221 = smul.u32 8, %s220
        %p222 = scmp.lt.s32.totalorder %s217, 9
        %s223 = scalar_select %p222, %s217, 9
        %s224 = smul.addr %s223, 8
        %s225 = scalar_lea.vmem %s0, %s224
        %s226 = smul.u32 8, %s18
        %s227 = ssub.s32 10, %s226
        %p228 = scmp.lt.s32.totalorder %s227, 8
        %s229 = scalar_select %p228, %s227, 8
        %s230 = smul.u32 8, %s229
        %p231 = scmp.lt.s32.totalorder %s18, 1
        %s232 = scalar_select %p231, %s18, 1
        %s233 = smul.addr %s232, 8
        %s234 = scalar_lea.vmem %s1, %s233
        %s235 = smul.u32 8, %s18
        %s236 = ssub.s32 10, %s235
        %p237 = scmp.lt.s32.totalorder %s236, 8
        %s238 = scalar_select %p237, %s236, 8
        %s239 = smul.u32 8, %s238
        %v240 = vld [vmem:[%s225] sm:$0xff]
        %v241 = vld [vmem:[%s225 + $0x8] sm:$0xff]
        %v242 = vld [vmem:[%s225 + $0x10] sm:$0xff]
        %v243 = vld [vmem:[%s225 + $0x18] sm:$0xff]
        %v244 = vld [vmem:[%s225 + $0x20] sm:$0xff]
        %v245 = vld [vmem:[%s225 + $0x28] sm:$0xff]
        %v246 = vld [vmem:[%s225 + $0x30] sm:$0xff]
        %v247 = vld [vmem:[%s225 + $0x38] sm:$0xff]
        %v248 = vld [vmem:[%s2] sm:$0xff]
        %v249 = vld [vmem:[%s2 + $0x8] sm:$0xff]
        %v250 = vld [vmem:[%s3] sm:$0x1]
        %v252 = vperm.slane %v250, 0
        %vm254 = vcmask 130048
        %v256 = vsel %vm254, %v240, 0
        %v259 = vsel %vm254, %v241, 0
        %v262 = vsel %vm254, %v242, 0
        %v265 = vsel %vm254, %v243, 0
        %v268 = vsel %vm254, %v244, 0
        %v271 = vsel %vm254, %v245, 0
        %v274 = vsel %vm254, %v246, 0
        %v277 = vsel %vm254, %v247, 0
        %279 = vmatpush.msra.mxu0 0.0
        %280 = vmatpush.msra.mxu0 0.0
        %281 = vmatpush.msra.mxu0 0.0
        %282 = vmatpush.msra.mxu0 0.0
        %283 = vmatpush.msra.mxu0 0.0
        %284 = vmatpush.msra.mxu0 0.0
        %285 = vmatpush.msra.mxu0 0.0
        %286 = vmatpush.msra.mxu0 0.0
        %287 = vmatpush.msra.mxu0 0.0
        %288 = vmatpush.msra.mxu0 0.0
        %289 = vmatpush.msra.mxu0 0.0
        %290 = vmatpush.msra.mxu0 0.0
        %291 = vmatpush.msra.mxu0 0.0
        %292 = vmatpush.msra.mxu0 0.0
        %293 = vmatpush.msra.mxu0 %v249
        %294 = vmatpush.msra.mxu0 %v248
        %295 = vmatmul.f32.gmra.mxu0 %v256
        %v296 = vpop.f32.mrf.mxu0
        %v297 = vadd.f32 %v252, %v296
        %298 = vmatmul.f32.gmra.mxu0 %v259
        %v299 = vpop.f32.mrf.mxu0
        %v300 = vadd.f32 %v252, %v299
        %301 = vmatmul.f32.gmra.mxu0 %v262
        %v302 = vpop.f32.mrf.mxu0
        %v303 = vadd.f32 %v252, %v302
        %304 = vmatmul.f32.gmra.mxu0 %v265
        %v305 = vpop.f32.mrf.mxu0
        %v306 = vadd.f32 %v252, %v305
        %307 = vmatmul.f32.gmra.mxu0 %v268
        %v308 = vpop.f32.mrf.mxu0
        %v309 = vadd.f32 %v252, %v308
        %310 = vmatmul.f32.gmra.mxu0 %v271
        %v311 = vpop.f32.mrf.mxu0
        %v312 = vadd.f32 %v252, %v311
        %313 = vmatmul.f32.gmra.mxu0 %v274
        %v314 = vpop.f32.mrf.mxu0
        %v315 = vadd.f32 %v252, %v314
        %316 = vmatmul.f32.gmra.mxu0 %v277
        %v317 = vpop.f32.mrf.mxu0
        %v318 = vadd.f32 %v252, %v317
        %319 = vdwg.mxu0
        %vm320 = vcmp.ge.f32.partialorder %v297, 0.0
        %vm321 = vcmp.ge.f32.partialorder %v300, 0.0
        %vm322 = vcmp.ge.f32.partialorder %v303, 0.0
        %vm323 = vcmp.ge.f32.partialorder %v306, 0.0
        %vm324 = vcmp.ge.f32.partialorder %v309, 0.0
        %vm325 = vcmp.ge.f32.partialorder %v312, 0.0
        %vm326 = vcmp.ge.f32.partialorder %v315, 0.0
        %vm327 = vcmp.ge.f32.partialorder %v318, 0.0
        %v328 = vmul.f32 %v297, 0.01
        %v329 = vmul.f32 %v300, 0.01
        %v330 = vmul.f32 %v303, 0.01
        %v331 = vmul.f32 %v306, 0.01
        %v332 = vmul.f32 %v309, 0.01
        %v333 = vmul.f32 %v312, 0.01
        %v334 = vmul.f32 %v315, 0.01
        %v335 = vmul.f32 %v318, 0.01
        %v336 = vsel %vm320, %v297, %v328
        %v337 = vsel %vm321, %v300, %v329
        %v338 = vsel %vm322, %v303, %v330
        %v339 = vsel %vm323, %v306, %v331
        %v340 = vsel %vm324, %v309, %v332
        %v341 = vsel %vm325, %v312, %v333
        %v342 = vsel %vm326, %v315, %v334
        %v343 = vsel %vm327, %v318, %v335
        %v344 = vld [vmem:[%s234] sm:$0xff]
        %v345 = vperm.slane %v344, 0
        %v346 = vlaneseq
        %v347 = vshrl.u32 %v346, 7
        %349 = vset.pattern.permute.xlu0 %v347
        %350 = vperm.xlu0 %349, %v345
        %v351 = vpop.permute.xlu0 %350
        %v352 = vperm.slane %v344, 1
        %v353 = vlaneseq
        %v354 = vshrl.u32 %v353, 7
        %356 = vset.pattern.permute.xlu0 %v354
        %357 = vperm.xlu0 %356, %v352
        %v358 = vpop.permute.xlu0 %357
        %v359 = vperm.slane %v344, 2
        %v360 = vlaneseq
        %v361 = vshrl.u32 %v360, 7
        %363 = vset.pattern.permute.xlu0 %v361
        %364 = vperm.xlu0 %363, %v359
        %v365 = vpop.permute.xlu0 %364
        %v366 = vperm.slane %v344, 3
        %v367 = vlaneseq
        %v368 = vshrl.u32 %v367, 7
        %370 = vset.pattern.permute.xlu0 %v368
        %371 = vperm.xlu0 %370, %v366
        %v372 = vpop.permute.xlu0 %371
        %v373 = vperm.slane %v344, 4
        %v374 = vlaneseq
        %v375 = vshrl.u32 %v374, 7
        %377 = vset.pattern.permute.xlu0 %v375
        %378 = vperm.xlu0 %377, %v373
        %v379 = vpop.permute.xlu0 %378
        %v380 = vperm.slane %v344, 5
        %v381 = vlaneseq
        %v382 = vshrl.u32 %v381, 7
        %384 = vset.pattern.permute.xlu0 %v382
        %385 = vperm.xlu0 %384, %v380
        %v386 = vpop.permute.xlu0 %385
        %v387 = vperm.slane %v344, 6
        %v388 = vlaneseq
        %v389 = vshrl.u32 %v388, 7
        %391 = vset.pattern.permute.xlu0 %v389
        %392 = vperm.xlu0 %391, %v387
        %v393 = vpop.permute.xlu0 %392
        %v394 = vperm.slane %v344, 7
        %v395 = vlaneseq
        %v396 = vshrl.u32 %v395, 7
        %398 = vset.pattern.permute.xlu0 %v396
        %399 = vperm.xlu0 %398, %v394
        %v400 = vpop.permute.xlu0 %399
        %v401 = vmul.f32 %v336, %v351
        %v402 = vmul.f32 %v337, %v358
        %v403 = vmul.f32 %v338, %v365
        %v404 = vmul.f32 %v339, %v372
        %v405 = vmul.f32 %v340, %v379
        %v406 = vmul.f32 %v341, %v386
        %v407 = vmul.f32 %v342, %v393
        %v408 = vmul.f32 %v343, %v400
        %vm409 = vcmp.gt.f32.partialorder %v351, 0.5
        %vm410 = vcmp.gt.f32.partialorder %v358, 0.5
        %vm411 = vcmp.gt.f32.partialorder %v365, 0.5
        %vm412 = vcmp.gt.f32.partialorder %v372, 0.5
        %vm413 = vcmp.gt.f32.partialorder %v379, 0.5
        %vm414 = vcmp.gt.f32.partialorder %v386, 0.5
        %vm415 = vcmp.gt.f32.partialorder %v393, 0.5
        %vm416 = vcmp.gt.f32.partialorder %v400, 0.5
        %v417 = vsel %vm409, 1, 0
        %v418 = vsel %vm410, 1, 0
        %v419 = vsel %vm411, 1, 0
        %v420 = vsel %vm412, 1, 0
        %v421 = vsel %vm413, 1, 0
        %v422 = vsel %vm414, 1, 0
        %v423 = vsel %vm415, 1, 0
        %v424 = vsel %vm416, 1, 0
        %vm425 = vcmp.eq.s32.totalorder %v417, 1
        %vm426 = vcmp.eq.s32.totalorder %v418, 1
        %vm427 = vcmp.eq.s32.totalorder %v419, 1
        %vm428 = vcmp.eq.s32.totalorder %v420, 1
        %vm429 = vcmp.eq.s32.totalorder %v421, 1
        %vm430 = vcmp.eq.s32.totalorder %v422, 1
        %vm431 = vcmp.eq.s32.totalorder %v423, 1
        %vm432 = vcmp.eq.s32.totalorder %v424, 1
        %v433 = vsel %vm425, %v336, -inf
        %v434 = vsel %vm426, %v337, -inf
        %v435 = vsel %vm427, %v338, -inf
        %v436 = vsel %vm428, %v339, -inf
        %v437 = vsel %vm429, %v340, -inf
        %v438 = vsel %vm430, %v341, -inf
        %v439 = vsel %vm431, %v342, -inf
        %v440 = vsel %vm432, %v343, -inf
        %vm441 = vcmask 261120
        %v442 = vsel %vm441, %v433, -inf
        %v443 = vrot.slane %v442, 4
        %v444 = vmax.f32 %v442, %v443
        %v445 = vrot.slane %v444, 2
        %v446 = vmax.f32 %v444, %v445
        %v447 = vrot.slane %v446, 1
        %v448 = vmax.f32 %v446, %v447
        %v449 = vsel %vm441, %v434, -inf
        %v450 = vrot.slane %v449, 4
        %v451 = vmax.f32 %v449, %v450
        %v452 = vrot.slane %v451, 2
        %v453 = vmax.f32 %v451, %v452
        %v454 = vrot.slane %v453, 1
        %v455 = vmax.f32 %v453, %v454
        %v456 = vsel %vm441, %v435, -inf
        %v457 = vrot.slane %v456, 4
        %v458 = vmax.f32 %v456, %v457
        %v459 = vrot.slane %v458, 2
        %v460 = vmax.f32 %v458, %v459
        %v461 = vrot.slane %v460, 1
        %v462 = vmax.f32 %v460, %v461
        %v463 = vsel %vm441, %v436, -inf
        %v464 = vrot.slane %v463, 4
        %v465 = vmax.f32 %v463, %v464
        %v466 = vrot.slane %v465, 2
        %v467 = vmax.f32 %v465, %v466
        %v468 = vrot.slane %v467, 1
        %v469 = vmax.f32 %v467, %v468
        %v470 = vsel %vm441, %v437, -inf
        %v471 = vrot.slane %v470, 4
        %v472 = vmax.f32 %v470, %v471
        %v473 = vrot.slane %v472, 2
        %v474 = vmax.f32 %v472, %v473
        %v475 = vrot.slane %v474, 1
        %v476 = vmax.f32 %v474, %v475
        %v477 = vsel %vm441, %v438, -inf
        %v478 = vrot.slane %v477, 4
        %v479 = vmax.f32 %v477, %v478
        %v480 = vrot.slane %v479, 2
        %v481 = vmax.f32 %v479, %v480
        %v482 = vrot.slane %v481, 1
        %v483 = vmax.f32 %v481, %v482
        %v484 = vsel %vm441, %v439, -inf
        %v485 = vrot.slane %v484, 4
        %v486 = vmax.f32 %v484, %v485
        %v487 = vrot.slane %v486, 2
        %v488 = vmax.f32 %v486, %v487
        %v489 = vrot.slane %v488, 1
        %v490 = vmax.f32 %v488, %v489
        %v491 = vsel %vm441, %v440, -inf
        %v492 = vrot.slane %v491, 4
        %v493 = vmax.f32 %v491, %v492
        %v494 = vrot.slane %v493, 2
        %v495 = vmax.f32 %v493, %v494
        %v496 = vrot.slane %v495, 1
        %v497 = vmax.f32 %v495, %v496
        %vm498 = vcmask 64512
        %v499 = vsel %vm498, %v344, -inf
        %500 = vmax.xlane.f32.xlu0 %v499
        %v501 = vpop.xlane.xlu0 %500
        %vm502 = vcmp.gt.f32.partialorder %v501, 0.5
        %v503 = vsel %vm502, 1, 0
        %vm504 = vcmp.eq.s32.totalorder %v503, 1
        %vm513 = vcmask 1041409
        %v514 = vsel %vm513, %v455, %v448
        %vm515 = vcmask 1042434
        %v516 = vsel %vm515, %v462, %v514
        %vm517 = vcmask 1043459
        %v518 = vsel %vm517, %v469, %v516
        %vm519 = vcmask 1044484
        %v520 = vsel %vm519, %v476, %v518
        %vm521 = vcmask 1045509
        %v522 = vsel %vm521, %v483, %v520
        %vm523 = vcmask 1046534
        %v524 = vsel %vm523, %v490, %v522
        %vm525 = vcmask 1047559
        %v526 = vsel %vm525, %v497, %v524
        %v528 = vsel %vm504, %v526, 0.0
        %v530 = vrot.slane %v528, 1
        %v531 = vrot.slane %v528, 2
        %v532 = vrot.slane %v528, 3
        %v533 = vrot.slane %v528, 4
        %v534 = vrot.slane %v528, 5
        %v535 = vrot.slane %v528, 6
        %v536 = vrot.slane %v528, 7
        %v537 = vperm.slane %v528, 0
        %v538 = vperm.slane %v530, 0
        %v539 = vperm.slane %v531, 0
        %v540 = vperm.slane %v532, 0
        %v541 = vperm.slane %v533, 0
        %v542 = vperm.slane %v534, 0
        %v543 = vperm.slane %v535, 0
        %v544 = vperm.slane %v536, 0
        %545 = vrot.lane.b32.xlu0 %v537, 32
        %v546 = vpop.permute.xlu0 %545
        %547 = vrot.lane.b32.xlu0 %v538, 32
        %v548 = vpop.permute.xlu0 %547
        %549 = vrot.lane.b32.xlu0 %v539, 32
        %v550 = vpop.permute.xlu0 %549
        %551 = vrot.lane.b32.xlu0 %v540, 32
        %v552 = vpop.permute.xlu0 %551
        %553 = vrot.lane.b32.xlu0 %v541, 32
        %v554 = vpop.permute.xlu0 %553
        %555 = vrot.lane.b32.xlu0 %v542, 32
        %v556 = vpop.permute.xlu0 %555
        %557 = vrot.lane.b32.xlu0 %v543, 32
        %v558 = vpop.permute.xlu0 %557
        %559 = vrot.lane.b32.xlu0 %v544, 32
        %v560 = vpop.permute.xlu0 %559
        %v569 = vsel %vm441, %v401, %v546
        %v570 = vsel %vm441, %v402, %v548
        %v571 = vsel %vm441, %v403, %v550
        %v572 = vsel %vm441, %v404, %v552
        %v573 = vsel %vm441, %v405, %v554
        %v574 = vsel %vm441, %v406, %v556
        %v575 = vsel %vm441, %v407, %v558
        %v576 = vsel %vm441, %v408, %v560
        %vm577 = vcmask 523264
        %578 = vst.msk [vmem:[%s216] sm:$0xff] %vm577, %v569
        %579 = vst.msk [vmem:[%s216 + $0x8] sm:$0xff] %vm577, %v570
        %580 = vst.msk [vmem:[%s216 + $0x10] sm:$0xff] %vm577, %v571
        %581 = vst.msk [vmem:[%s216 + $0x18] sm:$0xff] %vm577, %v572
        %582 = vst.msk [vmem:[%s216 + $0x20] sm:$0xff] %vm577, %v573
        %583 = vst.msk [vmem:[%s216 + $0x28] sm:$0xff] %vm577, %v574
        %584 = vst.msk [vmem:[%s216 + $0x30] sm:$0xff] %vm577, %v575
        %585 = vst.msk [vmem:[%s216 + $0x38] sm:$0xff] %vm577, %v576
        %s586 = sand.u32 %s120, 1
        %s587 = scalar_lea.sflag [#allocation3], %s586
        %s588 = sand.u32 %s120, 1
        %s589 = smul.addr %s588, 64
        %s590 = scalar_lea.vmem [#allocation2], %s589
        // Predicated region
        $region37: #{tpu_custom_call.1} parent=35 // pred_check
          %p591 = pneg %p130
        $region38: #{tpu_custom_call.1} parent=35 // pred_check_branch
          %593 = sbr.rel (%p591) target = $region40
        $region39: #{tpu_custom_call.1} parent=35 // pred_region
          %s594 = smul.u32 8, %s18
          %s595 = ssub.s32 10, %s594
          %p596 = scmp.lt.s32.totalorder %s595, 8
          %s597 = scalar_select %p596, %s595, 8
          %s598 = smul.u32 8, %s597
          %s599 = ssub.s32 64, %s598
          %s600 = sshll.u32 %s599, 4
          %601 = vsyncadd %s587, %s600
          %p602 = scmp.ne.s32.totalorder 0, %s598
          %s603 = smul.addr %s594, 8
          %s604 = scalar_lea.hbm %s4, %s603
          %s605 = smul.u32 8, %s597
          %s606 = sshll.u32 %s590, 4
          %s607 = int_to_ptr.vmem [resolvable:$true] %s606
          %s608 = sshll.u32 %s604, 4
          %s609 = int_to_ptr.hbm [resolvable:$true] %s608
          %s610 = sshll.u32 %s605, 4
          %614 = dma.vmem_to_hbm [thread:$0]  (%p602), %s607, %s610, %s609, %s587, 128, 128, 8
        $region40: #{tpu_custom_call.1} parent=35 // pred_fallthru
          _
      $region36: #{tpu_custom_call.1} parent=5 // pred_fallthru
        _
      %p615 = scmp.le.s32.totalorder 2, %s13
      // Predicated region
      $region41: #{tpu_custom_call.1} parent=5 // pred_check
        %p616 = pneg %p615
      $region42: #{tpu_custom_call.1} parent=5 // pred_check_branch
        %618 = sbr.rel (%p616) target = $region44
      $region43: #{tpu_custom_call.1} parent=5 // pred_region
        %s619 = ssub.s32 %s13, 2
        // Predicated region
        $region45: #{tpu_custom_call.1} parent=43 // pred_check
          %p620 = pneg %p136
        $region46: #{tpu_custom_call.1} parent=43 // pred_check_branch
          %622 = sbr.rel (%p620) target = $region48
        $region47: #{tpu_custom_call.1} parent=43 // pred_region
          %s623 = sand.u32 %s121, 1
          %s624 = scalar_lea.sflag [#allocation3], %s623
          %s625 = sand.u32 %s121, 1
          %s626 = smul.addr %s625, 64
          %s627 = scalar_lea.vmem [#allocation2], %s626
          %629 = dma.done %s624, 1024
        $region48: #{tpu_custom_call.1} parent=43 // pred_fallthru
          _
      $region44: #{tpu_custom_call.1} parent=5 // pred_fallthru
        _
    $region6: #{tpu_custom_call.1} parent=1 // loop_footer
      %s17 = sadd.s32 1, %s13
    $region7: #{tpu_custom_call.1} parent=1 // loop_footer_branch
      %12 = sbr.rel target = $region3
    $region8: #{tpu_custom_call.1} parent=1 // loop_exit
      _
    %630 = vsyncpa [#allocation3], 1
    %s631 = scalar_lea.sflag [#allocation3], 1
    %632 = vsyncpa %s631, 1

</llo_original>
